<compile_context>
chip_gen: v7x
topology: tpu7x:2x2x1
jax: 0.10.0
libtpu: 0.0.40
codegen_flags: <defaults>
</compile_context>

<pallas_src>
import math

import jax
import jax.numpy as jnp
from jax.experimental import pallas as pl
from jax.experimental.pallas import tpu as pltpu


def _round_up(x, m):
    return ((x + m - 1) // m) * m


def make_out_cls_forward(w, b, *, use_bf16=True, tm_max=1024):
    """Build a jitted Out_Cls.forward for fixed parameters.

    w : (D, N) stored (in, out) so the kernel computes x @ w + b directly
    b : (N,)
    Returns forward(x) where x is (..., D) and the result is (..., N) float32.
    """
    # TODO(synk): training-mode nn.Dropout(p=0.4) (Bernoulli mask + 1/(1-p) scale) is
    #             not implemented; eval-mode dropout is the identity, reproduced here.
    D, N = w.shape
    N_PAD = 128                      # lane width for the in-VMEM weight/bias operands
    assert N <= N_PAD, "cls_label wider than one lane group is not handled"

    mm_dtype = jnp.bfloat16 if use_bf16 else jnp.float32

    # ---- parameter prep (runs ONCE, hoisted out of the per-call path) ----
    w_p = jnp.zeros((D, N_PAD), mm_dtype).at[:, :N].set(w.astype(mm_dtype))
    b_p = jnp.zeros((1, N_PAD), jnp.float32).at[0, :N].set(b.astype(jnp.float32))

    # ---- kernel ----
    def _kernel(x_ref, w_ref, b_ref, o_ref):
        # In-kernel cast to the MXU operand dtype (hidden under the x DMA).
        x_blk = x_ref[...].astype(mm_dtype)
        # (tm, D) @ (D, 128) on the MXU, f32 accumulate; f32 bias add on the VPU.
        acc = jnp.dot(x_blk, w_ref[...], preferred_element_type=jnp.float32)
        res = acc + b_ref[...]
        # Narrow store: only the N real classifier columns go back to HBM.
        o_ref[...] = res[:, :N]

    # ---- per-call forward (jitted; retraces per input shape) ----
    @jax.jit
    def forward(x):
        orig_shape = x.shape
        assert orig_shape[-1] == D, "last dim of x must equal output_dim"
        M = math.prod(orig_shape[:-1]) if len(orig_shape) > 1 else 1
        x2 = x.reshape(M, D)

        # Row tile: large (up to 1024) for HBM-roofline efficiency, 16-aligned.
        tm = min(tm_max, _round_up(max(M, 1), 16))
        grid = (pl.cdiv(M, tm),)

        out = pl.pallas_call(
            _kernel,
            out_shape=jax.ShapeDtypeStruct((M, N), jnp.float32),
            grid=grid,
            in_specs=[
                pl.BlockSpec((tm, D), lambda i: (i, 0)),       # activation row tile
                pl.BlockSpec((D, N_PAD), lambda i: (0, 0)),    # padded weight (VMEM only)
                pl.BlockSpec((1, N_PAD), lambda i: (0, 0)),    # padded bias row
            ],
            out_specs=pl.BlockSpec((tm, N), lambda i: (i, 0)),  # narrow HBM output
            compiler_params=pltpu.CompilerParams(
                dimension_semantics=("parallel",),
                vmem_limit_bytes=32 * 1024 * 1024,
            ),
        )(x2, w_p, b_p)

        return out.reshape(*orig_shape[:-1], N)

    return forward


# --------------------------------------------------------------------------- main

if __name__ == "__main__":
    B = 2
    OUTPUT_DIM = 256      # Out_Cls(output_dim) as used in SAModel (pooled feature width)
    CLS_LABEL = 2

    key = jax.random.PRNGKey(0)
    kx, kw, kb, ky, kz = jax.random.split(key, 5)
    x = jax.random.normal(kx, (B, OUTPUT_DIM), jnp.float32) * 0.1
    w = jax.random.normal(kw, (OUTPUT_DIM, CLS_LABEL), jnp.float32) * 0.1
    b = jax.random.normal(kb, (CLS_LABEL,), jnp.float32) * 0.1

    out_cls = make_out_cls_forward(w, b)

    # pooled-feature input (B, D) — the way Out_Cls is called in the model
    out = out_cls(x)
    jax.block_until_ready(out)
    ref = x @ w + b
    assert out.shape == (B, CLS_LABEL)
    assert jnp.allclose(out, ref, atol=5e-2, rtol=5e-2)

    # 3-D input (B, S, D) exercising the row-flattening path
    x3 = jax.random.normal(ky, (B, 8, OUTPUT_DIM), jnp.float32) * 0.1
    out3 = out_cls(x3)
    jax.block_until_ready(out3)
    ref3 = x3 @ w + b
    assert out3.shape == (B, 8, CLS_LABEL)
    assert jnp.allclose(out3, ref3, atol=5e-2, rtol=5e-2)

    # larger input exercising the multi-tile parallel grid and the ragged last block
    x4 = jax.random.normal(kz, (B, 600, OUTPUT_DIM), jnp.float32) * 0.1
    out4 = out_cls(x4)
    jax.block_until_ready(out4)
    ref4 = x4 @ w + b
    assert out4.shape == (B, 600, CLS_LABEL)
    assert jnp.allclose(out4, ref4, atol=5e-2, rtol=5e-2)

    print("KERNEL_OK")
</pallas_src>

<mosaic_0001>
module attributes {stable_mosaic.version = 11 : i64} {
  func.func @_kernel(%arg0: i32, %arg1: memref<16x256xf32, #tpu.memory_space<vmem>>, %arg2: memref<256x128xbf16, #tpu.memory_space<vmem>>, %arg3: memref<1x128xf32, #tpu.memory_space<vmem>>, %arg4: memref<16x2xf32, #tpu.memory_space<vmem>>) attributes {dimension_semantics = [#tpu.dimension_semantics<parallel>], iteration_bounds = array<i64: 1>, scalar_prefetch = 0 : i64, scratch_operands = 0 : i64, tpu.core_type = #tpu.core_type<tc>, window_params = [{transform_indices = @transform_0, window_bounds = array<i64: 16, 256>}, {pipeline_mode = #tpu.pipeline_mode<synchronous>, transform_indices = @transform_1, window_bounds = array<i64: 256, 128>}, {pipeline_mode = #tpu.pipeline_mode<synchronous>, transform_indices = @transform_2, window_bounds = array<i64: 1, 128>}, {transform_indices = @transform_3, window_bounds = array<i64: 16, 2>}]} {
    %c0 = arith.constant 0 : index
    %c0_0 = arith.constant 0 : index
    %0 = vector.load %arg1[%c0, %c0_0] : memref<16x256xf32, #tpu.memory_space<vmem>>, vector<16x256xf32>
    %1 = arith.truncf %0 : vector<16x256xf32> to vector<16x256xbf16>
    %c0_1 = arith.constant 0 : index
    %c0_2 = arith.constant 0 : index
    %2 = vector.load %arg2[%c0_1, %c0_2] : memref<256x128xbf16, #tpu.memory_space<vmem>>, vector<256x128xbf16>
    %cst = arith.constant dense<0.000000e+00> : vector<16x128xf32>
    %3 = tpu.matmul %1, %2, %cst {dimension_numbers = #tpu.dot_dimension_numbers<[1], [0], [0], [1], [0, 0, 1, 1], [], []>} : vector<16x256xbf16>, vector<256x128xbf16>, vector<16x128xf32> -> vector<16x128xf32>
    %c0_3 = arith.constant 0 : index
    %c0_4 = arith.constant 0 : index
    %4 = vector.load %arg3[%c0_3, %c0_4] : memref<1x128xf32, #tpu.memory_space<vmem>>, vector<1x128xf32>
    %5 = vector.broadcast %4 : vector<1x128xf32> to vector<16x128xf32>
    %6 = arith.addf %3, %5 : vector<16x128xf32>
    %7 = vector.extract_strided_slice %6 {offsets = [0, 0], sizes = [16, 2], strides = [1, 1]} : vector<16x128xf32> to vector<16x2xf32>
    %c0_5 = arith.constant 0 : index
    %c0_6 = arith.constant 0 : index
    %8 = vector.load %arg4[%c0_5, %c0_6] : memref<16x2xf32, #tpu.memory_space<vmem>>, vector<16x2xf32>
    tpu.vector_store %arg4[%c0_5, %c0_6], %7 {strides = array<i32>} : memref<16x2xf32, #tpu.memory_space<vmem>>, vector<16x2xf32>,
    return
  }
  func.func @transform_0(%arg0: i32) -> (i32, i32) {
    %c0_i32 = arith.constant 0 : i32
    %c0_i32_0 = arith.constant 0 : i32
    return %arg0, %c0_i32 : i32, i32
  }
  func.func @transform_1(%arg0: i32) -> (i32, i32) {
    %c0_i32 = arith.constant 0 : i32
    %c0_i32_0 = arith.constant 0 : i32
    %c0_i32_1 = arith.constant 0 : i32
    return %c0_i32, %c0_i32_0 : i32, i32
  }
  func.func @transform_2(%arg0: i32) -> (i32, i32) {
    %c0_i32 = arith.constant 0 : i32
    %c0_i32_0 = arith.constant 0 : i32
    %c0_i32_1 = arith.constant 0 : i32
    return %c0_i32, %c0_i32_0 : i32, i32
  }
  func.func @transform_3(%arg0: i32) -> (i32, i32) {
    %c0_i32 = arith.constant 0 : i32
    %c0_i32_0 = arith.constant 0 : i32
    return %arg0, %c0_i32 : i32, i32
  }
}

</mosaic_0001>

<llo_original>
// kernel: forward.1
$region0: #{forward.1}
  #allocation0 [shape = 'u32[]', space=smem, size = 0x4, offset = 0x4, fixed_abs, tag = 'smem constant byte address 0x4 - core index']
  #allocation1 [shape = 'u32[144,128]{1,0:T(1,128)}', space=vmem, size = 0x12000, scoped, tag = 'internal scratch']
  %s0 = inlined_call_operand.hbm [shape: f32[2,256], index: 0, kind: input, shape index: {}]
  %s1 = inlined_call_operand.hbm [shape: bf16[256,128], index: 1, kind: input, shape index: {}]
  %s2 = inlined_call_operand.vmem [shape: f32[1,128], index: 2, kind: input, shape index: {}]
  %s3 = inlined_call_operand.hbm [shape: f32[2,2], index: 3, kind: output, shape index: {}]
  %s4 = sld [smem:[#allocation0]]
  $region30: #{forward.1} parent=0
    _
  %s6 = ssub.s32 1, %s4
  %s7 = scalar_select 0, %s6, %s4
  $region1: #{forward.1} parent=0
    #allocation2 [shape = 'u8[16384]{0}', space=vmem, size = 0x4000, scoped, tag = 'input window, operand 0, single buffered']
    #allocation3 [shape = 's32[1]{0}', space=sflag, size = 0x4, scoped, tag = 'scoped memory for forward.1']
    #allocation4 [shape = 's32[1]{0}', space=sflag, size = 0x4, scoped, tag = 'scoped memory for forward.1']
    #allocation5 [shape = 'u8[65536]{0}', space=vmem, size = 0x10000, scoped, tag = 'input window, operand 1, single buffered']
    #allocation6 [shape = 's32[1]{0}', space=sflag, size = 0x4, scoped, tag = 'scoped memory for forward.1']
    #allocation7 [shape = 'u8[8192]{0}', space=vmem, size = 0x2000, scoped, tag = 'output window, operand 0, single buffered']
    %8 = vsyncpa [#allocation3], 0
    %9 = vsyncpa [#allocation6], 0
    %10 = vsyncpa [#allocation4], 0
    // Predicated region
    $region2: #{forward.1} parent=1 // pred_check
      _
    $region3: #{forward.1} parent=1 // pred_check_branch
      %12 = sbr.rel (0) target = $region5
    $region4: #{forward.1} parent=1 // pred_region
      %s14 = ssub.s32 512, 64
      %15 = vsyncadd [#allocation3], %s14
      %s16 = sshll.u32 [#allocation2], 4
      %s17 = int_to_ptr.vmem [resolvable:$true] %s16
      %22 = dma.hbm_to_vmem [thread:$0]  %s0, 64, %s17, [#allocation3], 64, 64, 4
    $region5: #{forward.1} parent=1 // pred_fallthru
      _
    // Predicated region
    $region6: #{forward.1} parent=1 // pred_check
      _
    $region7: #{forward.1} parent=1 // pred_check_branch
      %24 = sbr.rel (0) target = $region9
    $region8: #{forward.1} parent=1 // pred_region
      %s26 = ssub.s32 2048, 2048
      %27 = vsyncadd [#allocation6], %s26
      %s28 = sshll.u32 [#allocation5], 4
      %s29 = int_to_ptr.vmem [resolvable:$true] %s28
      %34 = dma.hbm_to_vmem [thread:$0]  %s1, 2048, %s29, [#allocation6], 64, 64, 4
    $region9: #{forward.1} parent=1 // pred_fallthru
      _
    // Predicated region
    $region10: #{forward.1} parent=1 // pred_check
      _
    $region11: #{forward.1} parent=1 // pred_check_branch
      %36 = sbr.rel (0) target = $region13
    $region12: #{forward.1} parent=1 // pred_region
      _
    $region13: #{forward.1} parent=1 // pred_fallthru
      _
    // Predicated region
    $region14: #{forward.1} parent=1 // pred_check
      _
    $region15: #{forward.1} parent=1 // pred_check_branch
      %38 = sbr.rel (0) target = $region17
    $region16: #{forward.1} parent=1 // pred_region
      %39 = dma.done [#allocation3], 512
    $region17: #{forward.1} parent=1 // pred_fallthru
      _
    // Predicated region
    $region18: #{forward.1} parent=1 // pred_check
      _
    $region19: #{forward.1} parent=1 // pred_check_branch
      %41 = sbr.rel (0) target = $region21
    $region20: #{forward.1} parent=1 // pred_region
      %42 = dma.done [#allocation6], 2048
    $region21: #{forward.1} parent=1 // pred_fallthru
      _
    %v44 = vld [vmem:[#allocation2] sm:$0xf]
    %v45 = vld [vmem:[#allocation2 + $0x4] sm:$0xf]
    %v46 = vld [vmem:[#allocation2 + $0x8] sm:$0xf]
    %v47 = vld [vmem:[#allocation2 + $0xc] sm:$0xf]
    %v48 = vld [vmem:[#allocation2 + $0x10] sm:$0xf]
    %v49 = vld [vmem:[#allocation2 + $0x14] sm:$0xf]
    %v50 = vld [vmem:[#allocation2 + $0x18] sm:$0xf]
    %v51 = vld [vmem:[#allocation2 + $0x1c] sm:$0xf]
    %v60 = vcombine.low %v44, %v45
    %v61 = vcombine.low %v46, %v47
    %v63 = vunpack.c.l.s4 1983009808
    %v64 = vunpack.c.0.s8 %v63
    %v65 = vlaneseq
    %v66 = vshrl.u32 %v65, 7
    %v67 = vsub.s32 %v64, %v66
    %v68 = vrot.slane %v60, %v67
    %v70 = vunpack.c.l.s4 1983009808
    %v71 = vunpack.c.0.s8 %v70
    %v72 = vlaneseq
    %v73 = vshrl.u32 %v72, 7
    %v74 = vsub.s32 %v71, %v73
    %v75 = vrot.slane %v61, %v74
    %v76 = vcombine.low %v68, %v75
    %v77 = vcombine.high %v68, %v75
    %v78 = vcombine.low %v48, %v49
    %v79 = vcombine.low %v50, %v51
    %v81 = vunpack.c.l.s4 1983009808
    %v82 = vunpack.c.0.s8 %v81
    %v83 = vlaneseq
    %v84 = vshrl.u32 %v83, 7
    %v85 = vsub.s32 %v82, %v84
    %v86 = vrot.slane %v78, %v85
    %v88 = vunpack.c.l.s4 1983009808
    %v89 = vunpack.c.0.s8 %v88
    %v90 = vlaneseq
    %v91 = vshrl.u32 %v90, 7
    %v92 = vsub.s32 %v89, %v91
    %v93 = vrot.slane %v79, %v92
    %v94 = vcombine.low %v86, %v93
    %v95 = vcombine.high %v86, %v93
    %v100 = vpack.c.bf16 %v94, %v76
    %v101 = vpack.c.bf16 %v95, %v77
    %v102 = vld [vmem:[#allocation5] sm:$0xf]
    %v103 = vld [vmem:[#allocation5 + $0x4] sm:$0xf]
    %v104 = vld [vmem:[#allocation5 + $0x8] sm:$0xf]
    %v105 = vld [vmem:[#allocation5 + $0xc] sm:$0xf]
    %v106 = vld [vmem:[#allocation5 + $0x10] sm:$0xf]
    %v107 = vld [vmem:[#allocation5 + $0x14] sm:$0xf]
    %v108 = vld [vmem:[#allocation5 + $0x18] sm:$0xf]
    %v109 = vld [vmem:[#allocation5 + $0x1c] sm:$0xf]
    %v110 = vld [vmem:[#allocation5 + $0x20] sm:$0xf]
    %v111 = vld [vmem:[#allocation5 + $0x24] sm:$0xf]
    %v112 = vld [vmem:[#allocation5 + $0x28] sm:$0xf]
    %v113 = vld [vmem:[#allocation5 + $0x2c] sm:$0xf]
    %v114 = vld [vmem:[#allocation5 + $0x30] sm:$0xf]
    %v115 = vld [vmem:[#allocation5 + $0x34] sm:$0xf]
    %v116 = vld [vmem:[#allocation5 + $0x38] sm:$0xf]
    %v117 = vld [vmem:[#allocation5 + $0x3c] sm:$0xf]
    %v118 = vld [vmem:[#allocation5 + $0x40] sm:$0xf]
    %v119 = vld [vmem:[#allocation5 + $0x44] sm:$0xf]
    %v120 = vld [vmem:[#allocation5 + $0x48] sm:$0xf]
    %v121 = vld [vmem:[#allocation5 + $0x4c] sm:$0xf]
    %v122 = vld [vmem:[#allocation5 + $0x50] sm:$0xf]
    %v123 = vld [vmem:[#allocation5 + $0x54] sm:$0xf]
    %v124 = vld [vmem:[#allocation5 + $0x58] sm:$0xf]
    %v125 = vld [vmem:[#allocation5 + $0x5c] sm:$0xf]
    %v126 = vld [vmem:[#allocation5 + $0x60] sm:$0xf]
    %v127 = vld [vmem:[#allocation5 + $0x64] sm:$0xf]
    %v128 = vld [vmem:[#allocation5 + $0x68] sm:$0xf]
    %v129 = vld [vmem:[#allocation5 + $0x6c] sm:$0xf]
    %v130 = vld [vmem:[#allocation5 + $0x70] sm:$0xf]
    %v131 = vld [vmem:[#allocation5 + $0x74] sm:$0xf]
    %v132 = vld [vmem:[#allocation5 + $0x78] sm:$0xf]
    %v133 = vld [vmem:[#allocation5 + $0x7c] sm:$0xf]
    %v134 = vld [vmem:[%s2] sm:$0x1]
    %v136 = vlaneseq
    %v137 = vshrl.u32 %v136, 7
    %v138 = vsub.s32 0, %v137
    %v139 = vrot.slane %v134, %v138
    %v173 = vunpack.c.l.b16 %v102
    %v174 = vunpack.c.l.b16 %v103
    %v175 = vunpack.c.l.b16 %v104
    %v176 = vunpack.c.l.b16 %v105
    %v177 = vunpack.c.l.b16 %v106
    %v178 = vunpack.c.l.b16 %v107
    %v179 = vunpack.c.l.b16 %v108
    %v180 = vunpack.c.l.b16 %v109
    %v181 = vunpack.c.l.b16 %v110
    %v182 = vunpack.c.l.b16 %v111
    %v183 = vunpack.c.l.b16 %v112
    %v184 = vunpack.c.l.b16 %v113
    %v185 = vunpack.c.l.b16 %v114
    %v186 = vunpack.c.l.b16 %v115
    %v187 = vunpack.c.l.b16 %v116
    %v188 = vunpack.c.l.b16 %v117
    %v189 = vunpack.c.l.b16 %v118
    %v190 = vunpack.c.l.b16 %v119
    %v191 = vunpack.c.l.b16 %v120
    %v192 = vunpack.c.l.b16 %v121
    %v193 = vunpack.c.l.b16 %v122
    %v194 = vunpack.c.l.b16 %v123
    %v195 = vunpack.c.l.b16 %v124
    %v196 = vunpack.c.l.b16 %v125
    %v197 = vunpack.c.l.b16 %v126
    %v198 = vunpack.c.l.b16 %v127
    %v199 = vunpack.c.l.b16 %v128
    %v200 = vunpack.c.l.b16 %v129
    %v201 = vunpack.c.l.b16 %v130
    %v202 = vunpack.c.l.b16 %v131
    %v203 = vunpack.c.l.b16 %v132
    %v204 = vunpack.c.l.b16 %v133
    %v205 = vpack.c.b16 %v174, %v173
    %v206 = vpack.c.b16 %v176, %v175
    %v207 = vpack.c.b16 %v178, %v177
    %v208 = vpack.c.b16 %v180, %v179
    %v209 = vpack.c.b16 %v182, %v181
    %v210 = vpack.c.b16 %v184, %v183
    %v211 = vpack.c.b16 %v186, %v185
    %v212 = vpack.c.b16 %v188, %v187
    %v213 = vpack.c.b16 %v190, %v189
    %v214 = vpack.c.b16 %v192, %v191
    %v215 = vpack.c.b16 %v194, %v193
    %v216 = vpack.c.b16 %v196, %v195
    %v217 = vpack.c.b16 %v198, %v197
    %v218 = vpack.c.b16 %v200, %v199
    %v219 = vpack.c.b16 %v202, %v201
    %v220 = vpack.c.b16 %v204, %v203
    %237 = vmatprep.subr.bf16.mxu0 0
    %238 = vmatpush1.bf16.msra.mxu0 %v205
    %239 = vmatprep.subr.bf16.mxu0 0
    %240 = vmatpush1.bf16.msra.mxu0 %v206
    %241 = vmatprep.subr.bf16.mxu0 0
    %242 = vmatpush1.bf16.msra.mxu0 %v207
    %243 = vmatprep.subr.bf16.mxu0 0
    %244 = vmatpush1.bf16.msra.mxu0 %v208
    %245 = vmatprep.subr.bf16.mxu0 0
    %246 = vmatpush1.bf16.msra.mxu0 %v209
    %247 = vmatprep.subr.bf16.mxu0 0
    %248 = vmatpush1.bf16.msra.mxu0 %v210
    %249 = vmatprep.subr.bf16.mxu0 0
    %250 = vmatpush1.bf16.msra.mxu0 %v211
    %251 = vmatprep.subr.bf16.mxu0 0
    %252 = vmatpush1.bf16.msra.mxu0 %v212
    %253 = vmatprep.subr.bf16.mxu0 0
    %254 = vmatpush1.bf16.msra.mxu0 %v213
    %255 = vmatprep.subr.bf16.mxu0 0
    %256 = vmatpush1.bf16.msra.mxu0 %v214
    %257 = vmatprep.subr.bf16.mxu0 0
    %258 = vmatpush1.bf16.msra.mxu0 %v215
    %259 = vmatprep.subr.bf16.mxu0 0
    %260 = vmatpush1.bf16.msra.mxu0 %v216
    %261 = vmatprep.subr.bf16.mxu0 0
    %262 = vmatpush1.bf16.msra.mxu0 %v217
    %263 = vmatprep.subr.bf16.mxu0 0
    %264 = vmatpush1.bf16.msra.mxu0 %v218
    %265 = vmatprep.subr.bf16.mxu0 0
    %266 = vmatpush1.bf16.msra.mxu0 %v219
    %267 = vmatprep.subr.bf16.mxu0 0
    %268 = vmatpush1.bf16.msra.mxu0 %v220
    %269 = vmatprep.mubr.bf16.mxu0 %v101
    %270 = vmatmul.mubr.bf16.gmra.mrb[0].mxu0 %v100
    %v271 = vpop.f32.mrb[0].mxu0
    %v272 = vadd.f32 %v139, %v271
    %v273 = vpop.f32.mrb[0].mxu0
    %v274 = vpop.f32.mrb[0].mxu0
    %v275 = vadd.f32 %v139, %v274
    %v276 = vpop.f32.mrb[0].mxu0
    %277 = vdwg.mxu0
    %vm278 = vcmask 15360
    %279 = vst.msk [vmem:[#allocation7] sm:$0xff] %vm278, %v272
    %280 = vst.msk [vmem:[#allocation7 + $0x8] sm:$0xff] %vm278, %v275
    // Predicated region
    $region22: #{forward.1} parent=1 // pred_check
      _
    $region23: #{forward.1} parent=1 // pred_check_branch
      %282 = sbr.rel (0) target = $region25
    $region24: #{forward.1} parent=1 // pred_region
      %s284 = ssub.s32 256, 32
      %285 = vsyncadd [#allocation4], %s284
      %s286 = sshll.u32 [#allocation7], 4
      %s287 = int_to_ptr.vmem [resolvable:$true] %s286
      %292 = dma.vmem_to_hbm [thread:$0]  %s287, 32, %s3, [#allocation4], 32, 32, 2
    $region25: #{forward.1} parent=1 // pred_fallthru
      _
    // Predicated region
    $region26: #{forward.1} parent=1 // pred_check
      _
    $region27: #{forward.1} parent=1 // pred_check_branch
      %294 = sbr.rel (0) target = $region29
    $region28: #{forward.1} parent=1 // pred_region
      %295 = dma.done [#allocation4], 256
    $region29: #{forward.1} parent=1 // pred_fallthru
      _
    %296 = vsyncpa [#allocation3], 1
    %297 = vsyncpa [#allocation6], 1
    %298 = vsyncpa [#allocation4], 1

</llo_original>
